<compile_context>
chip_gen: v5e
topology: v5e:2x2
jax: 0.10.0
libtpu: 0.0.40
codegen_flags: <defaults>
</compile_context>

<pallas_src>
import jax
import jax.numpy as jnp
from jax.experimental import pallas as pl
from jax.experimental.pallas import tpu as pltpu


def _category_encoder_kernel(idx_ref, table_ref, out_ref):
    """idx_ref:   (tn, 1)        int32 VMEM  - clamped category ids for this tile
       table_ref: (v_pad, o_pad) f32   VMEM  - relu(emb @ W.T + b), resident across grid
       out_ref:   (tn, o_pad)    f32   VMEM  - gathered rows (one-hot MXU gather)."""
    tn = out_ref.shape[0]
    v_pad = table_ref.shape[0]
    idx = idx_ref[...]                                             # (tn, 1) int32, sublane-aligned
    onehot = (jax.lax.broadcasted_iota(jnp.int32, (tn, v_pad), 1) == idx)
    # Pure row gather as a single MXU op + one unmasked full-width store.
    out_ref[...] = jnp.dot(onehot.astype(jnp.float32), table_ref[...],
                           preferred_element_type=jnp.float32)


def category_encoder(category, emb_table, weight, bias, *, tn=512):
    """JAX wrapper matching CategoryEncoder.forward.

    category : int array of arbitrary shape (e.g. [batch, num_news])
    emb_table: (num_categories + 1, E) float32, row 0 is the padding row (zeros)
    weight   : (O, E) float32  (PyTorch nn.Linear weight layout)
    bias     : (O,)   float32
    returns  : float32 array of shape category.shape + (O,)
    """
    orig_shape = category.shape
    flat = category.reshape(-1).astype(jnp.int32)                  # (N,)
    n = flat.shape[0]
    v = emb_table.shape[0]
    o = weight.shape[0]

    # Clamp ids (jnp.take semantics); also guards padded-column selection.
    flat = jnp.clip(flat, 0, v - 1)

    # Fuse linear + bias + ReLU into the table: relu((E @ W.T + b))[idx] == reference.
    # padding_idx=0: emb row 0 is zero -> fused row 0 == relu(bias), as in PyTorch.
    # TODO(synk): cache this precompute across calls when the weights are static.
    table = jnp.maximum(
        jnp.dot(emb_table.astype(jnp.float32), weight.astype(jnp.float32).T,
                precision=jax.lax.Precision.HIGHEST)
        + bias.astype(jnp.float32)[None, :],
        0.0)                                                        # (V, O)

    # Lane-dense output: pad O up to a multiple of 128 (full-width vst).
    o_pad = max(128, ((o + 127) // 128) * 128)
    if o_pad != o:
        table = jnp.pad(table, ((0, 0), (0, o_pad - o)))
    # Pad V (sublane dim of the resident table / one-hot contraction dim) to 8.
    v_pad = ((v + 7) // 8) * 8
    if v_pad != v:
        table = jnp.pad(table, ((0, v_pad - v), (0, 0)))

    # Row tiling: tn rows per grid step (multiple of 8); pad index stream with 0.
    tn = max(8, min(tn, ((n + 7) // 8) * 8))
    n_pad = ((n + tn - 1) // tn) * tn
    if n_pad != n:
        flat = jnp.pad(flat, (0, n_pad - n))                        # 0 = padding id
    idx_col = flat.reshape(n_pad, 1)                                # sublane-aligned ids

    # Explicit VMEM budget: resident table (x2 buffers worst case) + pipelined
    # output tiles + index tiles + headroom.
    table_bytes = v_pad * o_pad * 4
    out_tile_bytes = tn * o_pad * 4
    vmem_limit = int(min(128 * 1024 * 1024,
                         2 * table_bytes + 4 * out_tile_bytes + (16 << 20)))

    out = pl.pallas_call(
        _category_encoder_kernel,
        out_shape=jax.ShapeDtypeStruct((n_pad, o_pad), jnp.float32),
        grid=(n_pad // tn,),
        in_specs=[
            # Per-tile index column (VMEM, scales with N; no SMEM prefetch).
            pl.BlockSpec((tn, 1), lambda i: (i, 0)),
            # Fused table: constant block index -> stays VMEM-resident.
            pl.BlockSpec((v_pad, o_pad), lambda i: (0, 0)),
        ],
        out_specs=pl.BlockSpec((tn, o_pad), lambda i: (i, 0)),
        compiler_params=pltpu.CompilerParams(
            dimension_semantics=("parallel",),
            vmem_limit_bytes=vmem_limit),
    )(idx_col, table)

    return out[:n, :o].reshape(*orig_shape, o)


def init_params(key, num_categories, category_embedding_dim, category_output_dim):
    """Deterministic synthetic parameters (shapes follow the nn.Module __init__)."""
    k_emb, k_w, k_b = jax.random.split(key, 3)
    emb = jax.random.normal(
        k_emb, (num_categories + 1, category_embedding_dim), dtype=jnp.float32)
    # padding_idx=0 -> embedding row 0 is zero
    emb = emb.at[0].set(0.0)
    bound = 1.0 / jnp.sqrt(category_embedding_dim)
    weight = jax.random.uniform(
        k_w, (category_output_dim, category_embedding_dim),
        minval=-bound, maxval=bound, dtype=jnp.float32)
    bias = jax.random.uniform(
        k_b, (category_output_dim,), minval=-bound, maxval=bound, dtype=jnp.float32)
    return emb, weight, bias


if __name__ == "__main__":
    num_categories = 10
    category_embedding_dim = 32
    category_output_dim = 16
    batch, num_news = 2, 4

    key = jax.random.PRNGKey(0)
    k_params, k_cat = jax.random.split(key)
    emb, weight, bias = init_params(
        k_params, num_categories, category_embedding_dim, category_output_dim)

    # category ids in [0, num_categories], 0 is the padding id
    category = jax.random.randint(
        k_cat, (batch, num_news), minval=0, maxval=num_categories + 1, dtype=jnp.int32)

    out = category_encoder(category, emb, weight, bias)
    out = jax.block_until_ready(out)

    # Pure-JAX reference: relu(linear(embedding(category)))
    ref = jax.nn.relu(
        jnp.dot(jnp.take(emb, category, axis=0), weight.T,
                precision=jax.lax.Precision.HIGHEST) + bias)
    assert out.shape == (batch, num_news, category_output_dim)
    assert jnp.allclose(out, ref, atol=1e-5, rtol=1e-5), float(jnp.max(jnp.abs(out - ref)))

    print("KERNEL_OK")
</pallas_src>

<mosaic_0001>
module attributes {stable_mosaic.version = 11 : i64} {
  func.func @_category_encoder_kernel(%arg0: i32, %arg1: memref<8x1xi32, #tpu.memory_space<vmem>>, %arg2: memref<16x128xf32, #tpu.memory_space<vmem>>, %arg3: memref<8x128xf32, #tpu.memory_space<vmem>>) attributes {dimension_semantics = [#tpu.dimension_semantics<parallel>], iteration_bounds = array<i64: 1>, scalar_prefetch = 0 : i64, scratch_operands = 0 : i64, tpu.core_type = #tpu.core_type<tc>, window_params = [{transform_indices = @transform_0, window_bounds = array<i64: 8, 1>}, {pipeline_mode = #tpu.pipeline_mode<synchronous>, transform_indices = @transform_1, window_bounds = array<i64: 16, 128>}, {transform_indices = @transform_2, window_bounds = array<i64: 8, 128>}]} {
    %c0 = arith.constant 0 : index
    %c0_0 = arith.constant 0 : index
    %0 = vector.load %arg1[%c0, %c0_0] : memref<8x1xi32, #tpu.memory_space<vmem>>, vector<8x1xi32>
    %1 = tpu.iota {dimensions = array<i32: 1>} : vector<8x16xi32>
    %2 = vector.broadcast %0 : vector<8x1xi32> to vector<8x16xi32>
    %3 = arith.cmpi eq, %1, %2 : vector<8x16xi32>
    %4 = arith.extui %3 : vector<8x16xi1> to vector<8x16xi32>
    %5 = arith.sitofp %4 : vector<8x16xi32> to vector<8x16xf32>
    %c0_1 = arith.constant 0 : index
    %c0_2 = arith.constant 0 : index
    %6 = vector.load %arg2[%c0_1, %c0_2] : memref<16x128xf32, #tpu.memory_space<vmem>>, vector<16x128xf32>
    %cst = arith.constant dense<0.000000e+00> : vector<8x128xf32>
    %7 = tpu.matmul %5, %6, %cst {dimension_numbers = #tpu.dot_dimension_numbers<[1], [0], [0], [1], [0, 0, 1, 1], [], []>} : vector<8x16xf32>, vector<16x128xf32>, vector<8x128xf32> -> vector<8x128xf32>
    %c0_3 = arith.constant 0 : index
    %c0_4 = arith.constant 0 : index
    %8 = vector.load %arg3[%c0_3, %c0_4] : memref<8x128xf32, #tpu.memory_space<vmem>>, vector<8x128xf32>
    tpu.vector_store %arg3[%c0_3, %c0_4], %7 {strides = array<i32>} : memref<8x128xf32, #tpu.memory_space<vmem>>, vector<8x128xf32>,
    return
  }
  func.func @transform_0(%arg0: i32) -> (i32, i32) {
    %c0_i32 = arith.constant 0 : i32
    %c0_i32_0 = arith.constant 0 : i32
    return %arg0, %c0_i32 : i32, i32
  }
  func.func @transform_1(%arg0: i32) -> (i32, i32) {
    %c0_i32 = arith.constant 0 : i32
    %c0_i32_0 = arith.constant 0 : i32
    %c0_i32_1 = arith.constant 0 : i32
    return %c0_i32, %c0_i32_0 : i32, i32
  }
  func.func @transform_2(%arg0: i32) -> (i32, i32) {
    %c0_i32 = arith.constant 0 : i32
    %c0_i32_0 = arith.constant 0 : i32
    return %arg0, %c0_i32 : i32, i32
  }
}

</mosaic_0001>

<llo_original>
// kernel: tpu_custom_call.1
$region0: #{tpu_custom_call.1}
  #allocation0 [shape = 'u32[]', space=smem, size = 0x4, offset = 0x4, fixed_abs, tag = 'smem constant byte address 0x4 - core index']
  #allocation1 [shape = 'u32[72,128]{1,0:T(1,128)}', space=vmem, size = 0x9000, scoped, tag = 'internal scratch']
  %s0 = inlined_call_operand.vmem [shape: s32[8,1], index: 0, kind: input, shape index: {}]
  %s1 = inlined_call_operand.hbm [shape: f32[16,128], index: 1, kind: input, shape index: {}]
  %s2 = inlined_call_operand.hbm [shape: f32[8,128], index: 2, kind: output, shape index: {}]
  %s3 = sld [smem:[#allocation0]]
  $region22: #{tpu_custom_call.1} parent=0
    _
  %s5 = ssub.s32 1, %s3
  %s6 = scalar_select 0, %s5, %s3
  $region1: #{tpu_custom_call.1} parent=0
    #allocation2 [shape = 'u8[8192]{0}', space=vmem, size = 0x2000, scoped, tag = 'input window, operand 1, single buffered']
    #allocation3 [shape = 's32[1]{0}', space=sflag, size = 0x4, scoped, tag = 'scoped memory for tpu_custom_call.1']
    #allocation4 [shape = 's32[1]{0}', space=sflag, size = 0x4, scoped, tag = 'scoped memory for tpu_custom_call.1']
    #allocation5 [shape = 'u8[4096]{0}', space=vmem, size = 0x1000, scoped, tag = 'output window, operand 0, single buffered']
    %7 = vsyncpa [#allocation3], 0
    %8 = vsyncpa [#allocation4], 0
    // Predicated region
    $region2: #{tpu_custom_call.1} parent=1 // pred_check
      _
    $region3: #{tpu_custom_call.1} parent=1 // pred_check_branch
      %10 = sbr.rel (0) target = $region5
    $region4: #{tpu_custom_call.1} parent=1 // pred_region
      _
    $region5: #{tpu_custom_call.1} parent=1 // pred_fallthru
      _
    // Predicated region
    $region6: #{tpu_custom_call.1} parent=1 // pred_check
      _
    $region7: #{tpu_custom_call.1} parent=1 // pred_check_branch
      %12 = sbr.rel (0) target = $region9
    $region8: #{tpu_custom_call.1} parent=1 // pred_region
      %14 = vsyncadd [#allocation3], 0
      %s15 = sshll.u32 %s1, 4
      %s16 = int_to_ptr.hbm [resolvable:$true] %s15
      %s17 = sshll.u32 [#allocation2], 4
      %s18 = int_to_ptr.vmem [resolvable:$true] %s17
      %23 = dma.hbm_to_vmem [thread:$0]  %s16, 256, %s18, [#allocation3], 128, 128, 8
    $region9: #{tpu_custom_call.1} parent=1 // pred_fallthru
      _
    // Predicated region
    $region10: #{tpu_custom_call.1} parent=1 // pred_check
      _
    $region11: #{tpu_custom_call.1} parent=1 // pred_check_branch
      %25 = sbr.rel (0) target = $region13
    $region12: #{tpu_custom_call.1} parent=1 // pred_region
      %27 = dma.done [#allocation3], 256
    $region13: #{tpu_custom_call.1} parent=1 // pred_fallthru
      _
    %v28 = vld [vmem:[%s0] sm:$0xff]
    %v29 = vlaneseq
    %v30 = vand.u32 %v29, 127
    %31 = vset.pattern.permute.xlu0 0
    %32 = vperm.xlu0 %31, %v28
    %v33 = vpop.permute.xlu0 %32
    %vm34 = vcmp.eq.s32.totalorder %v30, %v33
    %v35 = vsel %vm34, 1, 0
    %v36 = vcvt.s32.f32 %v35
    %v37 = vld [vmem:[#allocation2] sm:$0xff]
    %v38 = vld [vmem:[#allocation2 + $0x8] sm:$0xff]
    %vm39 = vcmask 130048
    %v41 = vsel %vm39, %v36, 0
    %43 = vmatpush.msra.mxu0 0.0
    %44 = vmatpush.msra.mxu0 0.0
    %45 = vmatpush.msra.mxu0 0.0
    %46 = vmatpush.msra.mxu0 0.0
    %47 = vmatpush.msra.mxu0 0.0
    %48 = vmatpush.msra.mxu0 0.0
    %49 = vmatpush.msra.mxu0 0.0
    %50 = vmatpush.msra.mxu0 0.0
    %51 = vmatpush.msra.mxu0 0.0
    %52 = vmatpush.msra.mxu0 0.0
    %53 = vmatpush.msra.mxu0 0.0
    %54 = vmatpush.msra.mxu0 0.0
    %55 = vmatpush.msra.mxu0 0.0
    %56 = vmatpush.msra.mxu0 0.0
    %57 = vmatpush.msra.mxu0 %v38
    %58 = vmatpush.msra.mxu0 %v37
    %59 = vmatmul.f32.gmra.mxu0 %v41
    %v60 = vpop.f32.mrf.mxu0
    %v61 = vadd.f32 0.0, %v60
    %62 = vdwg.mxu0
    %63 = vst [vmem:[#allocation5] sm:$0xff] %v61
    // Predicated region
    $region14: #{tpu_custom_call.1} parent=1 // pred_check
      _
    $region15: #{tpu_custom_call.1} parent=1 // pred_check_branch
      %65 = sbr.rel (0) target = $region17
    $region16: #{tpu_custom_call.1} parent=1 // pred_region
      %67 = vsyncadd [#allocation4], 0
      %s69 = sshll.u32 [#allocation5], 4
      %s70 = int_to_ptr.vmem [resolvable:$true] %s69
      %s71 = sshll.u32 %s2, 4
      %s72 = int_to_ptr.hbm [resolvable:$true] %s71
      %74 = dma.vmem_to_hbm [thread:$0]  %s70, 128, %s72, [#allocation4]
    $region17: #{tpu_custom_call.1} parent=1 // pred_fallthru
      _
    // Predicated region
    $region18: #{tpu_custom_call.1} parent=1 // pred_check
      _
    $region19: #{tpu_custom_call.1} parent=1 // pred_check_branch
      %76 = sbr.rel (0) target = $region21
    $region20: #{tpu_custom_call.1} parent=1 // pred_region
      %78 = dma.done [#allocation4], 128
    $region21: #{tpu_custom_call.1} parent=1 // pred_fallthru
      _
    %79 = vsyncpa [#allocation3], 1
    %80 = vsyncpa [#allocation4], 1

</llo_original>
